<compile_context>
chip_gen: v6e
topology: v6e:2x2x1
jax: 0.10.0
libtpu: 0.0.40
codegen_flags: <defaults>
</compile_context>

<pallas_src>
import jax
import jax.numpy as jnp
from jax.experimental import pallas as pl
from jax.experimental.pallas import tpu as pltpu

LOG_STD_MIN = -20.0
LOG_STD_MAX = 2.0
LANE = 128
SUBLANE = 8


def _round_up(x, m):
    return ((x + m - 1) // m) * m


def _cdiv(a, b):
    return -(-a // b)


# ---------------------------------------------------------------------------
# Kernel
# ---------------------------------------------------------------------------
def a_net_kernel(s_ref, w1_ref, b1_ref, w2_ref, b2_ref, wh_ref, bh_ref, out_ref):
    """One batch tile of the A_net forward.

    h    = ReLU(ReLU(s @ W1 + b1) @ W2 + b2)
    head = h @ W_head + b_head        # fused [mean | log_std] in one lane slab
    out  = where(lane >= head_w/2, exp(clip(head, -20, 2)), head)
    """
    s = s_ref[...]
    h = jnp.dot(s, w1_ref[...], preferred_element_type=jnp.float32) + b1_ref[...]
    h = jnp.maximum(h, 0.0)
    h = jnp.dot(h, w2_ref[...], preferred_element_type=jnp.float32) + b2_ref[...]
    h = jnp.maximum(h, 0.0)

    # Single fused head matmul: one MXU push for both heads.
    head = jnp.dot(h, wh_ref[...], preferred_element_type=jnp.float32) + bh_ref[...]

    head_w = out_ref.shape[-1]
    std_off = head_w // 2
    lane = jax.lax.broadcasted_iota(jnp.int32, head.shape, dimension=1)
    std_vals = jnp.exp(jnp.clip(head, LOG_STD_MIN, LOG_STD_MAX))
    out_ref[...] = jnp.where(lane >= std_off, std_vals, head).astype(out_ref.dtype)


# ---------------------------------------------------------------------------
# One-time parameter preparation (hoisted out of the per-call path)
# ---------------------------------------------------------------------------
def prepare_params(params, action_n):
    """Pad net_width to a lane multiple and fuse the two heads into one slab.

    Returns (prepped_arrays, half) where half is the lane offset of log_std
    inside the fused head slab (head width = 2 * half).
    """
    w1, b1, w2, b2, wm, bm, ws, bs = params          # (in, out) layout
    state_n, net_width = w1.shape

    nwp = _round_up(net_width, LANE)                 # lane-dense hidden width
    half = 64 if 2 * action_n <= LANE else _round_up(action_n, LANE)
    head_w = 2 * half                                # multiple of 128

    f32 = jnp.float32
    w1p = jnp.zeros((state_n, nwp), f32).at[:, :net_width].set(w1)
    b1p = jnp.zeros((1, nwp), f32).at[:, :net_width].set(b1)
    w2p = jnp.zeros((nwp, nwp), f32).at[:net_width, :net_width].set(w2)
    b2p = jnp.zeros((1, nwp), f32).at[:, :net_width].set(b2)
    # Fused head: mean in lanes [0:action_n], log_std in lanes [half:half+action_n].
    whp = (jnp.zeros((nwp, head_w), f32)
           .at[:net_width, :action_n].set(wm)
           .at[:net_width, half:half + action_n].set(ws))
    bhp = (jnp.zeros((1, head_w), f32)
           .at[:, :action_n].set(bm)
           .at[:, half:half + action_n].set(bs))
    # Zero hidden-pad units pass through ReLU as exact zeros -> results unchanged.
    return (w1p, b1p, w2p, b2p, whp, bhp), half


# ---------------------------------------------------------------------------
# Forward wrappers
# ---------------------------------------------------------------------------
def a_net_forward_padded(s, prepped_arrays, *, max_batch_tile=4096):
    """Runs the kernel; returns the padded (b_pad, head_w) fused output slab.

    Consumers that can index the slab directly (e.g. a tanh-squash sampler)
    should use this to avoid re-reading the output from HBM for unpacking.
    """
    w1, b1, w2, b2, wh, bh = prepped_arrays
    batch, state_n = s.shape
    nwp = w1.shape[1]
    head_w = wh.shape[1]

    # --- Batch tiling: even split (minimal padding), >=2 steps for v7x's 2 TCs.
    n_steps = _cdiv(batch, max_batch_tile)
    if batch > SUBLANE:
        n_steps = max(n_steps, 2)
    tb = _round_up(_cdiv(batch, n_steps), SUBLANE)
    b_pad = tb * n_steps
    if b_pad != batch:
        s = jnp.pad(s, ((0, b_pad - batch), (0, 0)))

    def resident(shape):
        # Same block every grid step -> weights stay VMEM-resident.
        return pl.BlockSpec(shape, lambda i: (0, 0))

    # VMEM footprint: double-buffered streamed input + output, 2x resident weights.
    vmem_est = 4 * (2 * (tb * state_n + tb * head_w)
                    + 2 * (state_n * nwp + nwp * nwp + nwp * head_w
                           + 2 * nwp + head_w))
    vmem_limit = int(min(64 << 20, max(32 << 20, 2 * vmem_est)))

    out = pl.pallas_call(
        a_net_kernel,
        out_shape=jax.ShapeDtypeStruct((b_pad, head_w), jnp.float32),
        grid=(n_steps,),
        in_specs=[
            pl.BlockSpec((tb, state_n), lambda i: (i, 0)),   # streamed input
            resident((state_n, nwp)),                        # W1
            resident((1, nwp)),                              # b1
            resident((nwp, nwp)),                            # W2
            resident((1, nwp)),                              # b2
            resident((nwp, head_w)),                         # fused head W
            resident((1, head_w)),                           # fused head b
        ],
        out_specs=pl.BlockSpec((tb, head_w), lambda i: (i, 0)),  # lane-dense slab
        compiler_params=pltpu.CompilerParams(
            dimension_semantics=("parallel",),               # shard batch over TCs
            vmem_limit_bytes=vmem_limit,
        ),
    )(s, w1, b1, w2, b2, wh, bh)
    return out


def a_net_forward(s, prepped_arrays, action_n, half, *, max_batch_tile=4096):
    """Convenience wrapper returning (mean, std), each (batch, action_n) f32."""
    batch = s.shape[0]
    out = a_net_forward_padded(s, prepped_arrays, max_batch_tile=max_batch_tile)
    # Single-slab output -> this unpack re-reads only head_w (=128) lanes/row,
    # half the previous traffic.  Use a_net_forward_padded directly to avoid it.
    mean = out[:batch, :action_n]
    std = out[:batch, half:half + action_n]
    return mean, std


# ---------------------------------------------------------------------------
# Deterministic parameter construction (mirrors layer_init: orthogonal weight
# with gain sqrt(2), constant bias 0.0).
# ---------------------------------------------------------------------------
def orthogonal_init(key, out_features, in_features, gain):
    rows, cols = out_features, in_features
    flat = jax.random.normal(key, (max(rows, cols), min(rows, cols)), jnp.float32)
    q, r = jnp.linalg.qr(flat)
    q = q * jnp.sign(jnp.diagonal(r))[None, :]   # deterministic sign
    if rows < cols:
        q = q.T
    w = gain * q[:rows, :cols]                   # (out, in) — PyTorch convention
    return w.T                                   # stored as (in, out) for x @ W


def make_params(key, state_n, action_n, net_width):
    gain = float(jnp.sqrt(2.0))
    k1, k2, k3, k4 = jax.random.split(key, 4)
    w1 = orthogonal_init(k1, net_width, state_n, gain)
    w2 = orthogonal_init(k2, net_width, net_width, gain)
    wm = orthogonal_init(k3, action_n, net_width, gain)
    ws = orthogonal_init(k4, action_n, net_width, gain)
    b1 = jnp.zeros((1, net_width), jnp.float32)
    b2 = jnp.zeros((1, net_width), jnp.float32)
    bm = jnp.zeros((1, action_n), jnp.float32)
    bs = jnp.zeros((1, action_n), jnp.float32)
    return (w1, b1, w2, b2, wm, bm, ws, bs)


def reference_forward(s, params):
    """Pure-JAX reference (mirrors the PyTorch forward)."""
    w1, b1, w2, b2, wm, bm, ws, bs = params
    h = jnp.maximum(s @ w1 + b1, 0.0)
    h = jnp.maximum(h @ w2 + b2, 0.0)
    mean = h @ wm + bm
    std = jnp.exp(jnp.clip(h @ ws + bs, LOG_STD_MIN, LOG_STD_MAX))
    return mean, std


# TODO(synk): get_distri/get_action (tanh-squashed Normal sampling) are thin JAX
# wrappers around this forward and are intentionally not part of the kernel.

if __name__ == "__main__":
    state_n, action_n, net_width, batch = 8, 4, 32, 10   # batch exercises padding

    key = jax.random.PRNGKey(0)
    k_params, k_state = jax.random.split(key)
    params = make_params(k_params, state_n, action_n, net_width)
    s = jax.random.normal(k_state, (batch, state_n), jnp.float32)

    # One-time (hoisted) head fusion + lane padding.
    prepped_arrays, half = prepare_params(params, action_n)

    fwd = jax.jit(lambda x: a_net_forward(x, prepped_arrays, action_n, half))
    mean, std = jax.block_until_ready(fwd(s))

    mean_ref, std_ref = reference_forward(s, params)
    assert mean.shape == (batch, action_n) and std.shape == (batch, action_n)
    assert jnp.allclose(mean, mean_ref, atol=1e-5, rtol=1e-5)
    assert jnp.allclose(std, std_ref, atol=1e-5, rtol=1e-5)
    assert bool(jnp.all(std > 0.0))

    print("KERNEL_OK")
</pallas_src>

<mosaic_0001>
module attributes {stable_mosaic.version = 11 : i64} {
  func.func @a_net_kernel(%arg0: i32, %arg1: memref<8x8xf32, #tpu.memory_space<vmem>>, %arg2: memref<8x128xf32, #tpu.memory_space<vmem>>, %arg3: memref<1x128xf32, #tpu.memory_space<vmem>>, %arg4: memref<128x128xf32, #tpu.memory_space<vmem>>, %arg5: memref<1x128xf32, #tpu.memory_space<vmem>>, %arg6: memref<128x128xf32, #tpu.memory_space<vmem>>, %arg7: memref<1x128xf32, #tpu.memory_space<vmem>>, %arg8: memref<8x128xf32, #tpu.memory_space<vmem>>) attributes {dimension_semantics = [#tpu.dimension_semantics<parallel>], iteration_bounds = array<i64: 2>, scalar_prefetch = 0 : i64, scratch_operands = 0 : i64, tpu.core_type = #tpu.core_type<tc>, window_params = [{transform_indices = @transform_0, window_bounds = array<i64: 8, 8>}, {pipeline_mode = #tpu.pipeline_mode<synchronous>, transform_indices = @transform_1, window_bounds = array<i64: 8, 128>}, {pipeline_mode = #tpu.pipeline_mode<synchronous>, transform_indices = @transform_2, window_bounds = array<i64: 1, 128>}, {pipeline_mode = #tpu.pipeline_mode<synchronous>, transform_indices = @transform_3, window_bounds = array<i64: 128, 128>}, {pipeline_mode = #tpu.pipeline_mode<synchronous>, transform_indices = @transform_4, window_bounds = array<i64: 1, 128>}, {pipeline_mode = #tpu.pipeline_mode<synchronous>, transform_indices = @transform_5, window_bounds = array<i64: 128, 128>}, {pipeline_mode = #tpu.pipeline_mode<synchronous>, transform_indices = @transform_6, window_bounds = array<i64: 1, 128>}, {transform_indices = @transform_7, window_bounds = array<i64: 8, 128>}]} {
    %c0 = arith.constant 0 : index
    %c0_0 = arith.constant 0 : index
    %0 = vector.load %arg1[%c0, %c0_0] : memref<8x8xf32, #tpu.memory_space<vmem>>, vector<8x8xf32>
    %c0_1 = arith.constant 0 : index
    %c0_2 = arith.constant 0 : index
    %1 = vector.load %arg2[%c0_1, %c0_2] : memref<8x128xf32, #tpu.memory_space<vmem>>, vector<8x128xf32>
    %cst = arith.constant dense<0.000000e+00> : vector<8x128xf32>
    %2 = tpu.matmul %0, %1, %cst {dimension_numbers = #tpu.dot_dimension_numbers<[1], [0], [0], [1], [0, 0, 1, 1], [], []>} : vector<8x8xf32>, vector<8x128xf32>, vector<8x128xf32> -> vector<8x128xf32>
    %c0_3 = arith.constant 0 : index
    %c0_4 = arith.constant 0 : index
    %3 = vector.load %arg3[%c0_3, %c0_4] : memref<1x128xf32, #tpu.memory_space<vmem>>, vector<1x128xf32>
    %4 = vector.broadcast %3 : vector<1x128xf32> to vector<8x128xf32>
    %5 = arith.addf %2, %4 : vector<8x128xf32>
    %cst_5 = arith.constant 0.000000e+00 : f32
    %6 = vector.broadcast %cst_5 : f32 to vector<8x128xf32>
    %7 = arith.maximumf %5, %6 : vector<8x128xf32>
    %c0_6 = arith.constant 0 : index
    %c0_7 = arith.constant 0 : index
    %8 = vector.load %arg4[%c0_6, %c0_7] : memref<128x128xf32, #tpu.memory_space<vmem>>, vector<128x128xf32>
    %cst_8 = arith.constant dense<0.000000e+00> : vector<8x128xf32>
    %9 = tpu.matmul %7, %8, %cst_8 {dimension_numbers = #tpu.dot_dimension_numbers<[1], [0], [0], [1], [0, 0, 1, 1], [], []>} : vector<8x128xf32>, vector<128x128xf32>, vector<8x128xf32> -> vector<8x128xf32>
    %c0_9 = arith.constant 0 : index
    %c0_10 = arith.constant 0 : index
    %10 = vector.load %arg5[%c0_9, %c0_10] : memref<1x128xf32, #tpu.memory_space<vmem>>, vector<1x128xf32>
    %11 = vector.broadcast %10 : vector<1x128xf32> to vector<8x128xf32>
    %12 = arith.addf %9, %11 : vector<8x128xf32>
    %cst_11 = arith.constant 0.000000e+00 : f32
    %13 = vector.broadcast %cst_11 : f32 to vector<8x128xf32>
    %14 = arith.maximumf %12, %13 : vector<8x128xf32>
    %c0_12 = arith.constant 0 : index
    %c0_13 = arith.constant 0 : index
    %15 = vector.load %arg6[%c0_12, %c0_13] : memref<128x128xf32, #tpu.memory_space<vmem>>, vector<128x128xf32>
    %cst_14 = arith.constant dense<0.000000e+00> : vector<8x128xf32>
    %16 = tpu.matmul %14, %15, %cst_14 {dimension_numbers = #tpu.dot_dimension_numbers<[1], [0], [0], [1], [0, 0, 1, 1], [], []>} : vector<8x128xf32>, vector<128x128xf32>, vector<8x128xf32> -> vector<8x128xf32>
    %c0_15 = arith.constant 0 : index
    %c0_16 = arith.constant 0 : index
    %17 = vector.load %arg7[%c0_15, %c0_16] : memref<1x128xf32, #tpu.memory_space<vmem>>, vector<1x128xf32>
    %18 = vector.broadcast %17 : vector<1x128xf32> to vector<8x128xf32>
    %19 = arith.addf %16, %18 : vector<8x128xf32>
    %20 = tpu.iota {dimensions = array<i32: 1>} : vector<8x128xi32>
    %cst_17 = arith.constant -2.000000e+01 : f32
    %cst_18 = arith.constant 2.000000e+00 : f32
    %21 = vector.broadcast %cst_17 : f32 to vector<8x128xf32>
    %22 = arith.maximumf %21, %19 : vector<8x128xf32>
    %23 = vector.broadcast %cst_18 : f32 to vector<8x128xf32>
    %24 = arith.minimumf %23, %22 : vector<8x128xf32>
    %25 = math.exp %24 : vector<8x128xf32>
    %c64_i32 = arith.constant 64 : i32
    %26 = vector.broadcast %c64_i32 : i32 to vector<8x128xi32>
    %27 = arith.cmpi sge, %20, %26 : vector<8x128xi32>
    %28 = arith.select %27, %25, %19 : vector<8x128xi1>, vector<8x128xf32>
    %c0_19 = arith.constant 0 : index
    %c0_20 = arith.constant 0 : index
    %29 = vector.load %arg8[%c0_19, %c0_20] : memref<8x128xf32, #tpu.memory_space<vmem>>, vector<8x128xf32>
    tpu.vector_store %arg8[%c0_19, %c0_20], %28 {strides = array<i32>} : memref<8x128xf32, #tpu.memory_space<vmem>>, vector<8x128xf32>,
    return
  }
  func.func @transform_0(%arg0: i32) -> (i32, i32) {
    %c0_i32 = arith.constant 0 : i32
    %c0_i32_0 = arith.constant 0 : i32
    return %arg0, %c0_i32 : i32, i32
  }
  func.func @transform_1(%arg0: i32) -> (i32, i32) {
    %c0_i32 = arith.constant 0 : i32
    %c0_i32_0 = arith.constant 0 : i32
    %c0_i32_1 = arith.constant 0 : i32
    return %c0_i32, %c0_i32_0 : i32, i32
  }
  func.func @transform_2(%arg0: i32) -> (i32, i32) {
    %c0_i32 = arith.constant 0 : i32
    %c0_i32_0 = arith.constant 0 : i32
    %c0_i32_1 = arith.constant 0 : i32
    return %c0_i32, %c0_i32_0 : i32, i32
  }
  func.func @transform_3(%arg0: i32) -> (i32, i32) {
    %c0_i32 = arith.constant 0 : i32
    %c0_i32_0 = arith.constant 0 : i32
    %c0_i32_1 = arith.constant 0 : i32
    return %c0_i32, %c0_i32_0 : i32, i32
  }
  func.func @transform_4(%arg0: i32) -> (i32, i32) {
    %c0_i32 = arith.constant 0 : i32
    %c0_i32_0 = arith.constant 0 : i32
    %c0_i32_1 = arith.constant 0 : i32
    return %c0_i32, %c0_i32_0 : i32, i32
  }
  func.func @transform_5(%arg0: i32) -> (i32, i32) {
    %c0_i32 = arith.constant 0 : i32
    %c0_i32_0 = arith.constant 0 : i32
    %c0_i32_1 = arith.constant 0 : i32
    return %c0_i32, %c0_i32_0 : i32, i32
  }
  func.func @transform_6(%arg0: i32) -> (i32, i32) {
    %c0_i32 = arith.constant 0 : i32
    %c0_i32_0 = arith.constant 0 : i32
    %c0_i32_1 = arith.constant 0 : i32
    return %c0_i32, %c0_i32_0 : i32, i32
  }
  func.func @transform_7(%arg0: i32) -> (i32, i32) {
    %c0_i32 = arith.constant 0 : i32
    %c0_i32_0 = arith.constant 0 : i32
    return %arg0, %c0_i32 : i32, i32
  }
}

</mosaic_0001>

<llo_original>
// kernel: _lambda_.1
$region0: #{_lambda_.1}
  #allocation0 [shape = 'u32[]', space=smem, size = 0x4, offset = 0x4, fixed_abs, tag = 'smem constant byte address 0x4 - core index']
  #allocation1 [shape = 'u32[144,128]{1,0:T(1,128)}', space=vmem, size = 0x12000, scoped, tag = 'internal scratch']
  %s0 = inlined_call_operand.vmem [shape: f32[16,8], index: 0, kind: input, shape index: {}]
  %s1 = inlined_call_operand.vmem [shape: f32[8,128], index: 1, kind: input, shape index: {}]
  %s2 = inlined_call_operand.vmem [shape: f32[1,128], index: 2, kind: input, shape index: {}, may-alias: {2,4,6}]
  %s3 = inlined_call_operand.hbm [shape: f32[128,128], index: 3, kind: input, shape index: {}]
  %s4 = inlined_call_operand.vmem [shape: f32[1,128], index: 4, kind: input, shape index: {}, may-alias: {2,4,6}]
  %s5 = inlined_call_operand.hbm [shape: f32[128,128], index: 5, kind: input, shape index: {}]
  %s6 = inlined_call_operand.vmem [shape: f32[1,128], index: 6, kind: input, shape index: {}, may-alias: {2,4,6}]
  %s7 = inlined_call_operand.vmem [shape: f32[16,128], index: 7, kind: output, shape index: {}]
  %s8 = sld [smem:[#allocation0]]
  $region69: #{_lambda_.1} parent=0
    _
  %s10 = ssub.s32 1, %s8
  %s11 = scalar_select 0, %s10, %s8
  $region1: #{_lambda_.1} parent=0
    #allocation2 [shape = 'u8[65536]{0}', space=vmem, size = 0x10000, scoped, tag = 'input window, operand 3, single buffered']
    #allocation3 [shape = 's32[2]{0}', space=sflag, size = 0x8, scoped, tag = 'scoped memory for _lambda_.1']
    #allocation4 [shape = 'u8[65536]{0}', space=vmem, size = 0x10000, scoped, tag = 'input window, operand 5, single buffered']
    #allocation5 [shape = 's32[1]{0}', space=sflag, size = 0x4, scoped, tag = 'scoped memory for _lambda_.1']
    %12 = vsyncpa [#allocation3], 0
    %13 = vsyncpa [#allocation5], 0
    loop: start=0, step=1, limit=4
    $region2: #{_lambda_.1} parent=1 // loop_pre_header
      _
    $region3: #{_lambda_.1} parent=1 // loop_header
      %s15 = sphi 0, %s19
      %p16 = scmp.ge.s32.totalorder %s15, 4
      %s25 = sphi 0, %s27
      %s28 = sphi 0, %s25
      %s29 = sphi 0, %s28
      %s45 = sphi 0, %s29
      %s49 = sphi 0, %s49
      %s51 = sphi 0, %s49
      %s52 = sphi 0, %s51
      %s66 = sphi 0, %s52
      %s70 = sphi 0, %s70
      %s72 = sphi 0, %s70
      %s73 = sphi 0, %s72
      %s87 = sphi 0, %s73
      %s91 = sphi 0, %s91
      %s93 = sphi 0, %s91
      %s94 = sphi 0, %s93
      %s108 = sphi 0, %s94
      %s112 = sphi 0, %s112
      %s114 = sphi 0, %s112
      %s115 = sphi 0, %s114
      %s129 = sphi 0, %s115
      %s133 = sphi 0, %s133
      %s135 = sphi 0, %s133
      %s136 = sphi 0, %s135
      %s150 = sphi 0, %s136
      %s154 = sphi 0, %s154
      %s156 = sphi 0, %s154
      %s157 = sphi 0, %s156
      %s171 = sphi 0, %s157
      %s177 = sphi 0, %s179
      %s180 = sphi 0, %s177
      %s181 = sphi 0, %s180
      %s197 = sphi 0, %s181
    $region4: #{_lambda_.1} parent=1 // loop_header_branch
      %18 = sbr.rel (%p16) target = $region8
    $region5: #{_lambda_.1} parent=1 // loop_body
      %s20 = ssub.s32 %s15, 1
      %s21 = ssub.s32 %s15, 2
      %s22 = sadd.s32 %s15, 1
      %s23 = ssub.s32 %s15, %s22
      %p24 = scmp.eq.s32.totalorder %s23, 0
      %s26 = sadd.s32 %s25, 1
      %s27 = scalar_select %p24, %s25, %s26
      %p30 = pneg %p24
      %p31 = scmp.eq.s32.totalorder %s15, 1
      %p32 = por %p30, %p31
      %p33 = scmp.ne.s32.totalorder %s25, %s28
      %p34 = scmp.eq.s32.totalorder %s15, 0
      %p35 = por %p33, %p34
      %p36 = scmp.ne.s32.totalorder %s25, %s28
      %p37 = scmp.eq.s32.totalorder %s20, 1
      %p38 = por %p36, %p37
      %p39 = scmp.ne.s32.totalorder %s28, %s29
      %p40 = scmp.eq.s32.totalorder %s20, 0
      %p41 = por %p39, %p40
      %p42 = scmp.ne.s32.totalorder %s28, %s29
      %p43 = scmp.eq.s32.totalorder %s21, 1
      %p44 = por %p42, %p43
      %p46 = scmp.ne.s32.totalorder %s29, %s45
      %p47 = scmp.eq.s32.totalorder %s21, 0
      %p48 = por %p46, %p47
      %s50 = sadd.s32 %s49, 1
      %p53 = scmp.eq.s32.totalorder %s15, 1
      %p54 = scmp.ne.s32.totalorder %s49, %s51
      %p55 = scmp.eq.s32.totalorder %s15, 0
      %p56 = por %p54, %p55
      %p57 = scmp.ne.s32.totalorder %s49, %s51
      %p58 = scmp.eq.s32.totalorder %s20, 1
      %p59 = por %p57, %p58
      %p60 = scmp.ne.s32.totalorder %s51, %s52
      %p61 = scmp.eq.s32.totalorder %s20, 0
      %p62 = por %p60, %p61
      %p63 = scmp.ne.s32.totalorder %s51, %s52
      %p64 = scmp.eq.s32.totalorder %s21, 1
      %p65 = por %p63, %p64
      %p67 = scmp.ne.s32.totalorder %s52, %s66
      %p68 = scmp.eq.s32.totalorder %s21, 0
      %p69 = por %p67, %p68
      %s71 = sadd.s32 %s70, 1
      %p74 = scmp.eq.s32.totalorder %s15, 1
      %p75 = scmp.ne.s32.totalorder %s70, %s72
      %p76 = scmp.eq.s32.totalorder %s15, 0
      %p77 = por %p75, %p76
      %p78 = scmp.ne.s32.totalorder %s70, %s72
      %p79 = scmp.eq.s32.totalorder %s20, 1
      %p80 = por %p78, %p79
      %p81 = scmp.ne.s32.totalorder %s72, %s73
      %p82 = scmp.eq.s32.totalorder %s20, 0
      %p83 = por %p81, %p82
      %p84 = scmp.ne.s32.totalorder %s72, %s73
      %p85 = scmp.eq.s32.totalorder %s21, 1
      %p86 = por %p84, %p85
      %p88 = scmp.ne.s32.totalorder %s73, %s87
      %p89 = scmp.eq.s32.totalorder %s21, 0
      %p90 = por %p88, %p89
      %s92 = sadd.s32 %s91, 1
      %p95 = scmp.eq.s32.totalorder %s15, 1
      %p96 = scmp.ne.s32.totalorder %s91, %s93
      %p97 = scmp.eq.s32.totalorder %s15, 0
      %p98 = por %p96, %p97
      %p99 = scmp.ne.s32.totalorder %s91, %s93
      %p100 = scmp.eq.s32.totalorder %s20, 1
      %p101 = por %p99, %p100
      %p102 = scmp.ne.s32.totalorder %s93, %s94
      %p103 = scmp.eq.s32.totalorder %s20, 0
      %p104 = por %p102, %p103
      %p105 = scmp.ne.s32.totalorder %s93, %s94
      %p106 = scmp.eq.s32.totalorder %s21, 1
      %p107 = por %p105, %p106
      %p109 = scmp.ne.s32.totalorder %s94, %s108
      %p110 = scmp.eq.s32.totalorder %s21, 0
      %p111 = por %p109, %p110
      %s113 = sadd.s32 %s112, 1
      %p116 = scmp.eq.s32.totalorder %s15, 1
      %p117 = scmp.ne.s32.totalorder %s112, %s114
      %p118 = scmp.eq.s32.totalorder %s15, 0
      %p119 = por %p117, %p118
      %p120 = scmp.ne.s32.totalorder %s112, %s114
      %p121 = scmp.eq.s32.totalorder %s20, 1
      %p122 = por %p120, %p121
      %p123 = scmp.ne.s32.totalorder %s114, %s115
      %p124 = scmp.eq.s32.totalorder %s20, 0
      %p125 = por %p123, %p124
      %p126 = scmp.ne.s32.totalorder %s114, %s115
      %p127 = scmp.eq.s32.totalorder %s21, 1
      %p128 = por %p126, %p127
      %p130 = scmp.ne.s32.totalorder %s115, %s129
      %p131 = scmp.eq.s32.totalorder %s21, 0
      %p132 = por %p130, %p131
      %s134 = sadd.s32 %s133, 1
      %p137 = scmp.eq.s32.totalorder %s15, 1
      %p138 = scmp.ne.s32.totalorder %s133, %s135
      %p139 = scmp.eq.s32.totalorder %s15, 0
      %p140 = por %p138, %p139
      %p141 = scmp.ne.s32.totalorder %s133, %s135
      %p142 = scmp.eq.s32.totalorder %s20, 1
      %p143 = por %p141, %p142
      %p144 = scmp.ne.s32.totalorder %s135, %s136
      %p145 = scmp.eq.s32.totalorder %s20, 0
      %p146 = por %p144, %p145
      %p147 = scmp.ne.s32.totalorder %s135, %s136
      %p148 = scmp.eq.s32.totalorder %s21, 1
      %p149 = por %p147, %p148
      %p151 = scmp.ne.s32.totalorder %s136, %s150
      %p152 = scmp.eq.s32.totalorder %s21, 0
      %p153 = por %p151, %p152
      %s155 = sadd.s32 %s154, 1
      %p158 = scmp.eq.s32.totalorder %s15, 1
      %p159 = scmp.ne.s32.totalorder %s154, %s156
      %p160 = scmp.eq.s32.totalorder %s15, 0
      %p161 = por %p159, %p160
      %p162 = scmp.ne.s32.totalorder %s154, %s156
      %p163 = scmp.eq.s32.totalorder %s20, 1
      %p164 = por %p162, %p163
      %p165 = scmp.ne.s32.totalorder %s156, %s157
      %p166 = scmp.eq.s32.totalorder %s20, 0
      %p167 = por %p165, %p166
      %p168 = scmp.ne.s32.totalorder %s156, %s157
      %p169 = scmp.eq.s32.totalorder %s21, 1
      %p170 = por %p168, %p169
      %p172 = scmp.ne.s32.totalorder %s157, %s171
      %p173 = scmp.eq.s32.totalorder %s21, 0
      %p174 = por %p172, %p173
      %s175 = ssub.s32 %s15, %s22
      %p176 = scmp.eq.s32.totalorder %s175, 0
      %s178 = sadd.s32 %s177, 1
      %s179 = scalar_select %p176, %s177, %s178
      %p182 = pneg %p176
      %p183 = scmp.eq.s32.totalorder %s15, 1
      %p184 = por %p182, %p183
      %p185 = scmp.ne.s32.totalorder %s177, %s180
      %p186 = scmp.eq.s32.totalorder %s15, 0
      %p187 = por %p185, %p186
      %p188 = scmp.ne.s32.totalorder %s177, %s180
      %p189 = scmp.eq.s32.totalorder %s20, 1
      %p190 = por %p188, %p189
      %p191 = scmp.ne.s32.totalorder %s180, %s181
      %p192 = scmp.eq.s32.totalorder %s20, 0
      %p193 = por %p191, %p192
      %p194 = scmp.ne.s32.totalorder %s180, %s181
      %p195 = scmp.eq.s32.totalorder %s21, 1
      %p196 = por %p194, %p195
      %p198 = scmp.ne.s32.totalorder %s181, %s197
      %p199 = scmp.eq.s32.totalorder %s21, 0
      %p200 = por %p198, %p199
      %p201 = scmp.le.s32.totalorder 1, %s15
      %p202 = scmp.lt.s32.totalorder %s15, 3
      %p203 = pnand %p201, %p202
      %p204 = pneg %p203
      // Predicated region
      $region9: #{_lambda_.1} parent=5 // pred_check
        _
      $region10: #{_lambda_.1} parent=5 // pred_check_branch
        %206 = sbr.rel (%p203) target = $region12
      $region11: #{_lambda_.1} parent=5 // pred_region
        %s207 = ssub.s32 %s15, 1
        // Predicated region
        $region13: #{_lambda_.1} parent=11 // pred_check
          %p208 = pneg %p62
        $region14: #{_lambda_.1} parent=11 // pred_check_branch
          %210 = sbr.rel (%p208) target = $region16
        $region15: #{_lambda_.1} parent=11 // pred_region
          _
        $region16: #{_lambda_.1} parent=11 // pred_fallthru
          _
        // Predicated region
        $region17: #{_lambda_.1} parent=11 // pred_check
          %p211 = pneg %p83
        $region18: #{_lambda_.1} parent=11 // pred_check_branch
          %213 = sbr.rel (%p211) target = $region20
        $region19: #{_lambda_.1} parent=11 // pred_region
          _
        $region20: #{_lambda_.1} parent=11 // pred_fallthru
          _
        // Predicated region
        $region21: #{_lambda_.1} parent=11 // pred_check
          %p214 = pneg %p104
        $region22: #{_lambda_.1} parent=11 // pred_check_branch
          %216 = sbr.rel (%p214) target = $region24
        $region23: #{_lambda_.1} parent=11 // pred_region
          %s218 = ssub.s32 2048, 2048
          %219 = vsyncadd [#allocation3], %s218
          %s220 = sshll.u32 [#allocation2], 4
          %s221 = int_to_ptr.vmem [resolvable:$true] %s220
          %226 = dma.hbm_to_vmem [thread:$0]  %s3, 2048, %s221, [#allocation3], 128, 128, 8
        $region24: #{_lambda_.1} parent=11 // pred_fallthru
          _
        // Predicated region
        $region25: #{_lambda_.1} parent=11 // pred_check
          %p227 = pneg %p125
        $region26: #{_lambda_.1} parent=11 // pred_check_branch
          %229 = sbr.rel (%p227) target = $region28
        $region27: #{_lambda_.1} parent=11 // pred_region
          _
        $region28: #{_lambda_.1} parent=11 // pred_fallthru
          _
        // Predicated region
        $region29: #{_lambda_.1} parent=11 // pred_check
          %p230 = pneg %p146
        $region30: #{_lambda_.1} parent=11 // pred_check_branch
          %232 = sbr.rel (%p230) target = $region32
        $region31: #{_lambda_.1} parent=11 // pred_region
          %s234 = ssub.s32 2048, 2048
          %235 = vsyncadd [#allocation5], %s234
          %s236 = sshll.u32 [#allocation4], 4
          %s237 = int_to_ptr.vmem [resolvable:$true] %s236
          %242 = dma.hbm_to_vmem [thread:$0]  %s5, 2048, %s237, [#allocation5], 128, 128, 8
        $region32: #{_lambda_.1} parent=11 // pred_fallthru
          _
        // Predicated region
        $region33: #{_lambda_.1} parent=11 // pred_check
          %p243 = pneg %p167
        $region34: #{_lambda_.1} parent=11 // pred_check_branch
          %245 = sbr.rel (%p243) target = $region36
        $region35: #{_lambda_.1} parent=11 // pred_region
          _
        $region36: #{_lambda_.1} parent=11 // pred_fallthru
          _
      $region12: #{_lambda_.1} parent=5 // pred_fallthru
        _
      %p246 = scmp.lt.s32.totalorder %s15, 2
      // Predicated region
      $region37: #{_lambda_.1} parent=5 // pred_check
        %p247 = pneg %p246
      $region38: #{_lambda_.1} parent=5 // pred_check_branch
        %249 = sbr.rel (%p247) target = $region40
      $region39: #{_lambda_.1} parent=5 // pred_region
        // Predicated region
        $region41: #{_lambda_.1} parent=39 // pred_check
          %p250 = pneg %p35
        $region42: #{_lambda_.1} parent=39 // pred_check_branch
          %252 = sbr.rel (%p250) target = $region44
        $region43: #{_lambda_.1} parent=39 // pred_region
          %p253 = scmp.lt.s32.totalorder %s15, 1
          %s254 = scalar_select %p253, %s15, 1
          %s255 = smul.addr %s254, 8
          %s256 = scalar_lea.vmem %s0, %s255
        $region44: #{_lambda_.1} parent=39 // pred_fallthru
          _
      $region40: #{_lambda_.1} parent=5 // pred_fallthru
        _
      %p257 = scmp.le.s32.totalorder 1, %s15
      %p258 = scmp.lt.s32.totalorder %s15, 3
      %p259 = pnand %p257, %p258
      %p260 = pneg %p259
      // Predicated region
      $region45: #{_lambda_.1} parent=5 // pred_check
        _
      $region46: #{_lambda_.1} parent=5 // pred_check_branch
        %262 = sbr.rel (%p259) target = $region48
      $region47: #{_lambda_.1} parent=5 // pred_region
        %s263 = ssub.s32 %s15, 1
        // Predicated region
        $region49: #{_lambda_.1} parent=47 // pred_check
          %p264 = pneg %p104
        $region50: #{_lambda_.1} parent=47 // pred_check_branch
          %266 = sbr.rel (%p264) target = $region52
        $region51: #{_lambda_.1} parent=47 // pred_region
          %267 = dma.done [#allocation3], 2048
        $region52: #{_lambda_.1} parent=47 // pred_fallthru
          _
        // Predicated region
        $region53: #{_lambda_.1} parent=47 // pred_check
          %p268 = pneg %p146
        $region54: #{_lambda_.1} parent=47 // pred_check_branch
          %270 = sbr.rel (%p268) target = $region56
        $region55: #{_lambda_.1} parent=47 // pred_region
          %271 = dma.done [#allocation5], 2048
        $region56: #{_lambda_.1} parent=47 // pred_fallthru
          _
        %p272 = scmp.lt.s32.totalorder %s20, 1
        %s273 = scalar_select %p272, %s20, 1
        %s274 = smul.addr %s273, 8
        %s275 = scalar_lea.vmem %s0, %s274
        %p276 = pneg %p41
        %p277 = pneg %p38
        %p278 = pneg %p62
        %p279 = pneg %p59
        %p280 = pneg %p83
        %p281 = pneg %p80
        %p282 = pneg %p104
        %p283 = pneg %p101
        %p284 = pneg %p125
        %p285 = pneg %p122
        %p286 = pneg %p146
        %p287 = pneg %p143
        %p288 = pneg %p167
        %p289 = pneg %p164
        %p290 = pneg %p193
        %p291 = pneg %p190
        %p292 = scmp.lt.s32.totalorder %s20, 1
        %s293 = scalar_select %p292, %s20, 1
        %s294 = smul.addr %s293, 8
        %s295 = scalar_lea.vmem %s7, %s294
        %p296 = scmp.lt.s32.totalorder %s20, 1
        %s297 = scalar_select %p296, %s20, 1
        %s298 = smul.addr %s297, 8
        %s299 = scalar_lea.vmem %s0, %s298
        %p300 = scmp.lt.s32.totalorder %s20, 1
        %s301 = scalar_select %p300, %s20, 1
        %s302 = smul.addr %s301, 8
        %s303 = scalar_lea.vmem %s7, %s302
        %v304 = vld [vmem:[%s299] sm:$0xff]
        %v305 = vld [vmem:[%s1] sm:$0xff]
        %v306 = vld [vmem:[%s2] sm:$0x1]
        %v308 = vlaneseq
        %v309 = vshrl.u32 %v308, 7
        %v310 = vsub.s32 0, %v309
        %v311 = vrot.slane %v306, %v310
        %vm313 = vcmask 64512
        %v315 = vsel %vm313, %v304, 0
        %317 = vmatprep.subr.mxu0 0.0
        %318 = vmatpush1.msra.mxu0 0.0
        %319 = vmatprep.subr.mxu0 0.0
        %320 = vmatpush1.msra.mxu0 0.0
        %321 = vmatprep.subr.mxu0 0.0
        %322 = vmatpush1.msra.mxu0 0.0
        %323 = vmatprep.subr.mxu0 0.0
        %324 = vmatpush1.msra.mxu0 0.0
        %325 = vmatprep.subr.mxu0 0.0
        %326 = vmatpush1.msra.mxu0 0.0
        %327 = vmatprep.subr.mxu0 0.0
        %328 = vmatpush1.msra.mxu0 0.0
        %329 = vmatprep.subr.mxu0 0.0
        %330 = vmatpush1.msra.mxu0 0.0
        %331 = vmatprep.subr.mxu0 0.0
        %332 = vmatpush1.msra.mxu0 0.0
        %333 = vmatprep.subr.mxu0 0.0
        %334 = vmatpush1.msra.mxu0 0.0
        %335 = vmatprep.subr.mxu0 0.0
        %336 = vmatpush1.msra.mxu0 0.0
        %337 = vmatprep.subr.mxu0 0.0
        %338 = vmatpush1.msra.mxu0 0.0
        %339 = vmatprep.subr.mxu0 0.0
        %340 = vmatpush1.msra.mxu0 0.0
        %341 = vmatprep.subr.mxu0 0.0
        %342 = vmatpush1.msra.mxu0 0.0
        %343 = vmatprep.subr.mxu0 0.0
        %344 = vmatpush1.msra.mxu0 0.0
        %345 = vmatprep.subr.mxu0 0.0
        %346 = vmatpush1.msra.mxu0 0.0
        %347 = vmatprep.subr.mxu0 0.0
        %348 = vmatpush1.msra.mxu0 %v305
        %349 = vmatprep.subr.mxu0 0.0
        %350 = vmatpush2.msra.mxu0 0.0
        %351 = vmatprep.subr.mxu0 0.0
        %352 = vmatpush2.msra.mxu0 0.0
        %353 = vmatprep.subr.mxu0 0.0
        %354 = vmatpush2.msra.mxu0 0.0
        %355 = vmatprep.subr.mxu0 0.0
        %356 = vmatpush2.msra.mxu0 0.0
        %357 = vmatprep.subr.mxu0 0.0
        %358 = vmatpush2.msra.mxu0 0.0
        %359 = vmatprep.subr.mxu0 0.0
        %360 = vmatpush2.msra.mxu0 0.0
        %361 = vmatprep.subr.mxu0 0.0
        %362 = vmatpush2.msra.mxu0 0.0
        %363 = vmatprep.subr.mxu0 0.0
        %364 = vmatpush2.msra.mxu0 0.0
        %365 = vmatprep.subr.mxu0 0.0
        %366 = vmatpush2.msra.mxu0 0.0
        %367 = vmatprep.subr.mxu0 0.0
        %368 = vmatpush2.msra.mxu0 0.0
        %369 = vmatprep.subr.mxu0 0.0
        %370 = vmatpush2.msra.mxu0 0.0
        %371 = vmatprep.subr.mxu0 0.0
        %372 = vmatpush2.msra.mxu0 0.0
        %373 = vmatprep.subr.mxu0 0.0
        %374 = vmatpush2.msra.mxu0 0.0
        %375 = vmatprep.subr.mxu0 0.0
        %376 = vmatpush2.msra.mxu0 0.0
        %377 = vmatprep.subr.mxu0 0.0
        %378 = vmatpush2.msra.mxu0 0.0
        %379 = vmatprep.subr.mxu0 0.0
        %380 = vmatpush2.msra.mxu0 0.0
        %381 = vmatprep.mubr.f32.mxu0 0.0
        %382 = vmatmul.mubr.f32.gmra.mxu0 %v315
        %v383 = vpop.f32.mrf.mxu0
        %v384 = vadd.f32 %v311, %v383
        %v385 = vpop.f32.mrf.mxu0
        %386 = vdwg.mxu0
        %v387 = vmax.f32 %v384, 0.0
        %v388 = vld [vmem:[#allocation2] sm:$0xff]
        %v389 = vld [vmem:[#allocation2 + $0x8] sm:$0xff]
        %v390 = vld [vmem:[#allocation2 + $0x10] sm:$0xff]
        %v391 = vld [vmem:[#allocation2 + $0x18] sm:$0xff]
        %v392 = vld [vmem:[#allocation2 + $0x20] sm:$0xff]
        %v393 = vld [vmem:[#allocation2 + $0x28] sm:$0xff]
        %v394 = vld [vmem:[#allocation2 + $0x30] sm:$0xff]
        %v395 = vld [vmem:[#allocation2 + $0x38] sm:$0xff]
        %v396 = vld [vmem:[#allocation2 + $0x40] sm:$0xff]
        %v397 = vld [vmem:[#allocation2 + $0x48] sm:$0xff]
        %v398 = vld [vmem:[#allocation2 + $0x50] sm:$0xff]
        %v399 = vld [vmem:[#allocation2 + $0x58] sm:$0xff]
        %v400 = vld [vmem:[#allocation2 + $0x60] sm:$0xff]
        %v401 = vld [vmem:[#allocation2 + $0x68] sm:$0xff]
        %v402 = vld [vmem:[#allocation2 + $0x70] sm:$0xff]
        %v403 = vld [vmem:[#allocation2 + $0x78] sm:$0xff]
        %v404 = vld [vmem:[%s4] sm:$0x1]
        %v406 = vlaneseq
        %v407 = vshrl.u32 %v406, 7
        %v408 = vsub.s32 0, %v407
        %v409 = vrot.slane %v404, %v408
        %411 = vmatprep.subr.mxu0 0.0
        %412 = vmatpush1.msra.mxu0 %v403
        %413 = vmatprep.subr.mxu0 0.0
        %414 = vmatpush1.msra.mxu0 %v402
        %415 = vmatprep.subr.mxu0 0.0
        %416 = vmatpush1.msra.mxu0 %v401
        %417 = vmatprep.subr.mxu0 0.0
        %418 = vmatpush1.msra.mxu0 %v400
        %419 = vmatprep.subr.mxu0 0.0
        %420 = vmatpush1.msra.mxu0 %v399
        %421 = vmatprep.subr.mxu0 0.0
        %422 = vmatpush1.msra.mxu0 %v398
        %423 = vmatprep.subr.mxu0 0.0
        %424 = vmatpush1.msra.mxu0 %v397
        %425 = vmatprep.subr.mxu0 0.0
        %426 = vmatpush1.msra.mxu0 %v396
        %427 = vmatprep.subr.mxu0 0.0
        %428 = vmatpush1.msra.mxu0 %v395
        %429 = vmatprep.subr.mxu0 0.0
        %430 = vmatpush1.msra.mxu0 %v394
        %431 = vmatprep.subr.mxu0 0.0
        %432 = vmatpush1.msra.mxu0 %v393
        %433 = vmatprep.subr.mxu0 0.0
        %434 = vmatpush1.msra.mxu0 %v392
        %435 = vmatprep.subr.mxu0 0.0
        %436 = vmatpush1.msra.mxu0 %v391
        %437 = vmatprep.subr.mxu0 0.0
        %438 = vmatpush1.msra.mxu0 %v390
        %439 = vmatprep.subr.mxu0 0.0
        %440 = vmatpush1.msra.mxu0 %v389
        %441 = vmatprep.subr.mxu0 0.0
        %442 = vmatpush1.msra.mxu0 %v388
        %443 = vmatprep.subr.mxu0 0.0
        %444 = vmatpush2.msra.mxu0 0.0
        %445 = vmatprep.subr.mxu0 0.0
        %446 = vmatpush2.msra.mxu0 0.0
        %447 = vmatprep.subr.mxu0 0.0
        %448 = vmatpush2.msra.mxu0 0.0
        %449 = vmatprep.subr.mxu0 0.0
        %450 = vmatpush2.msra.mxu0 0.0
        %451 = vmatprep.subr.mxu0 0.0
        %452 = vmatpush2.msra.mxu0 0.0
        %453 = vmatprep.subr.mxu0 0.0
        %454 = vmatpush2.msra.mxu0 0.0
        %455 = vmatprep.subr.mxu0 0.0
        %456 = vmatpush2.msra.mxu0 0.0
        %457 = vmatprep.subr.mxu0 0.0
        %458 = vmatpush2.msra.mxu0 0.0
        %459 = vmatprep.subr.mxu0 0.0
        %460 = vmatpush2.msra.mxu0 0.0
        %461 = vmatprep.subr.mxu0 0.0
        %462 = vmatpush2.msra.mxu0 0.0
        %463 = vmatprep.subr.mxu0 0.0
        %464 = vmatpush2.msra.mxu0 0.0
        %465 = vmatprep.subr.mxu0 0.0
        %466 = vmatpush2.msra.mxu0 0.0
        %467 = vmatprep.subr.mxu0 0.0
        %468 = vmatpush2.msra.mxu0 0.0
        %469 = vmatprep.subr.mxu0 0.0
        %470 = vmatpush2.msra.mxu0 0.0
        %471 = vmatprep.subr.mxu0 0.0
        %472 = vmatpush2.msra.mxu0 0.0
        %473 = vmatprep.subr.mxu0 0.0
        %474 = vmatpush2.msra.mxu0 0.0
        %475 = vmatprep.mubr.f32.mxu0 0.0
        %476 = vmatmul.mubr.f32.gmra.mxu0 %v387
        %v477 = vpop.f32.mrf.mxu0
        %v478 = vadd.f32 %v409, %v477
        %v479 = vpop.f32.mrf.mxu0
        %480 = vdwg.mxu0
        %v481 = vmax.f32 %v478, 0.0
        %v482 = vld [vmem:[#allocation4] sm:$0xff]
        %v483 = vld [vmem:[#allocation4 + $0x8] sm:$0xff]
        %v484 = vld [vmem:[#allocation4 + $0x10] sm:$0xff]
        %v485 = vld [vmem:[#allocation4 + $0x18] sm:$0xff]
        %v486 = vld [vmem:[#allocation4 + $0x20] sm:$0xff]
        %v487 = vld [vmem:[#allocation4 + $0x28] sm:$0xff]
        %v488 = vld [vmem:[#allocation4 + $0x30] sm:$0xff]
        %v489 = vld [vmem:[#allocation4 + $0x38] sm:$0xff]
        %v490 = vld [vmem:[#allocation4 + $0x40] sm:$0xff]
        %v491 = vld [vmem:[#allocation4 + $0x48] sm:$0xff]
        %v492 = vld [vmem:[#allocation4 + $0x50] sm:$0xff]
        %v493 = vld [vmem:[#allocation4 + $0x58] sm:$0xff]
        %v494 = vld [vmem:[#allocation4 + $0x60] sm:$0xff]
        %v495 = vld [vmem:[#allocation4 + $0x68] sm:$0xff]
        %v496 = vld [vmem:[#allocation4 + $0x70] sm:$0xff]
        %v497 = vld [vmem:[#allocation4 + $0x78] sm:$0xff]
        %v498 = vld [vmem:[%s6] sm:$0x1]
        %v500 = vlaneseq
        %v501 = vshrl.u32 %v500, 7
        %v502 = vsub.s32 0, %v501
        %v503 = vrot.slane %v498, %v502
        %505 = vmatprep.subr.mxu0 0.0
        %506 = vmatpush1.msra.mxu0 %v497
        %507 = vmatprep.subr.mxu0 0.0
        %508 = vmatpush1.msra.mxu0 %v496
        %509 = vmatprep.subr.mxu0 0.0
        %510 = vmatpush1.msra.mxu0 %v495
        %511 = vmatprep.subr.mxu0 0.0
        %512 = vmatpush1.msra.mxu0 %v494
        %513 = vmatprep.subr.mxu0 0.0
        %514 = vmatpush1.msra.mxu0 %v493
        %515 = vmatprep.subr.mxu0 0.0
        %516 = vmatpush1.msra.mxu0 %v492
        %517 = vmatprep.subr.mxu0 0.0
        %518 = vmatpush1.msra.mxu0 %v491
        %519 = vmatprep.subr.mxu0 0.0
        %520 = vmatpush1.msra.mxu0 %v490
        %521 = vmatprep.subr.mxu0 0.0
        %522 = vmatpush1.msra.mxu0 %v489
        %523 = vmatprep.subr.mxu0 0.0
        %524 = vmatpush1.msra.mxu0 %v488
        %525 = vmatprep.subr.mxu0 0.0
        %526 = vmatpush1.msra.mxu0 %v487
        %527 = vmatprep.subr.mxu0 0.0
        %528 = vmatpush1.msra.mxu0 %v486
        %529 = vmatprep.subr.mxu0 0.0
        %530 = vmatpush1.msra.mxu0 %v485
        %531 = vmatprep.subr.mxu0 0.0
        %532 = vmatpush1.msra.mxu0 %v484
        %533 = vmatprep.subr.mxu0 0.0
        %534 = vmatpush1.msra.mxu0 %v483
        %535 = vmatprep.subr.mxu0 0.0
        %536 = vmatpush1.msra.mxu0 %v482
        %537 = vmatprep.subr.mxu0 0.0
        %538 = vmatpush2.msra.mxu0 0.0
        %539 = vmatprep.subr.mxu0 0.0
        %540 = vmatpush2.msra.mxu0 0.0
        %541 = vmatprep.subr.mxu0 0.0
        %542 = vmatpush2.msra.mxu0 0.0
        %543 = vmatprep.subr.mxu0 0.0
        %544 = vmatpush2.msra.mxu0 0.0
        %545 = vmatprep.subr.mxu0 0.0
        %546 = vmatpush2.msra.mxu0 0.0
        %547 = vmatprep.subr.mxu0 0.0
        %548 = vmatpush2.msra.mxu0 0.0
        %549 = vmatprep.subr.mxu0 0.0
        %550 = vmatpush2.msra.mxu0 0.0
        %551 = vmatprep.subr.mxu0 0.0
        %552 = vmatpush2.msra.mxu0 0.0
        %553 = vmatprep.subr.mxu0 0.0
        %554 = vmatpush2.msra.mxu0 0.0
        %555 = vmatprep.subr.mxu0 0.0
        %556 = vmatpush2.msra.mxu0 0.0
        %557 = vmatprep.subr.mxu0 0.0
        %558 = vmatpush2.msra.mxu0 0.0
        %559 = vmatprep.subr.mxu0 0.0
        %560 = vmatpush2.msra.mxu0 0.0
        %561 = vmatprep.subr.mxu0 0.0
        %562 = vmatpush2.msra.mxu0 0.0
        %563 = vmatprep.subr.mxu0 0.0
        %564 = vmatpush2.msra.mxu0 0.0
        %565 = vmatprep.subr.mxu0 0.0
        %566 = vmatpush2.msra.mxu0 0.0
        %567 = vmatprep.subr.mxu0 0.0
        %568 = vmatpush2.msra.mxu0 0.0
        %569 = vmatprep.mubr.f32.mxu0 0.0
        %570 = vmatmul.mubr.f32.gmra.mxu0 %v481
        %v571 = vpop.f32.mrf.mxu0
        %v572 = vadd.f32 %v503, %v571
        %v573 = vpop.f32.mrf.mxu0
        %574 = vdwg.mxu0
        %v575 = vlaneseq
        %v576 = vand.u32 %v575, 127
        %v577 = vmax.f32 %v572, -20.0
        %v578 = vmin.f32 %v577, 2.0
        %v579 = vmul.f32 %v578, 1.442695
        %v580 = vpow.pop %v579
        %vm581 = vcmp.ge.s32.totalorder %v576, 64
        %v582 = vsel %vm581, %v580, %v572
        %583 = vst [vmem:[%s303] sm:$0xff] %v582
        %p584 = scmp.lt.s32.totalorder %s20, 1
        %s585 = scalar_select %p584, %s20, 1
        %s586 = smul.addr %s585, 8
        %s587 = scalar_lea.vmem %s7, %s586
        // Predicated region
        $region57: #{_lambda_.1} parent=47 // pred_check
          %p588 = pneg %p190
        $region58: #{_lambda_.1} parent=47 // pred_check_branch
          %590 = sbr.rel (%p588) target = $region60
        $region59: #{_lambda_.1} parent=47 // pred_region
          _
        $region60: #{_lambda_.1} parent=47 // pred_fallthru
          _
      $region48: #{_lambda_.1} parent=5 // pred_fallthru
        _
      %p591 = scmp.le.s32.totalorder 2, %s15
      // Predicated region
      $region61: #{_lambda_.1} parent=5 // pred_check
        %p592 = pneg %p591
      $region62: #{_lambda_.1} parent=5 // pred_check_branch
        %594 = sbr.rel (%p592) target = $region64
      $region63: #{_lambda_.1} parent=5 // pred_region
        %s595 = ssub.s32 %s15, 2
        // Predicated region
        $region65: #{_lambda_.1} parent=63 // pred_check
          %p596 = pneg %p196
        $region66: #{_lambda_.1} parent=63 // pred_check_branch
          %598 = sbr.rel (%p596) target = $region68
        $region67: #{_lambda_.1} parent=63 // pred_region
          %p599 = scmp.lt.s32.totalorder %s21, 1
          %s600 = scalar_select %p599, %s21, 1
          %s601 = smul.addr %s600, 8
          %s602 = scalar_lea.vmem %s7, %s601
        $region68: #{_lambda_.1} parent=63 // pred_fallthru
          _
      $region64: #{_lambda_.1} parent=5 // pred_fallthru
        _
    $region6: #{_lambda_.1} parent=1 // loop_footer
      %s19 = sadd.s32 1, %s15
    $region7: #{_lambda_.1} parent=1 // loop_footer_branch
      %14 = sbr.rel target = $region3
    $region8: #{_lambda_.1} parent=1 // loop_exit
      _
    %603 = vsyncpa [#allocation3], 1
    %s604 = scalar_lea.sflag [#allocation3], 1
    %605 = vsyncpa %s604, 1
    %606 = vsyncpa [#allocation5], 1

</llo_original>
